<compile_context>
chip_gen: v7x
topology: tpu7x:2x2x1
jax: 0.10.0
libtpu: 0.0.40
codegen_flags: <defaults>
</compile_context>

<pallas_src>
import functools

import jax
import jax.numpy as jnp
from jax import lax
from jax.experimental import pallas as pl
from jax.experimental.pallas import tpu as pltpu


def _causal_conv1d_kernel(x_ref, w_ref, b_ref, o_ref, rhs_ref, *,
                          K, IC, ICP, dilation):
    # x_ref:   (1, B, IC, L)    input block for one group (compute dtype)
    # w_ref:   (1, OC, K*ICP)   im2col weights for this group (compute dtype)
    # b_ref:   (1, OC, 1)       bias for this group (f32, sublane layout)
    # o_ref:   (1, OC, B*L)     output block (lane-dense, column = b*L + t)
    # rhs_ref: (K*ICP, B*L)     VMEM im2col scratch (compute dtype)
    _, B, _, L = x_ref.shape
    cdt = rhs_ref.dtype

    # Build the im2col right-hand side:
    #   rhs[k*ICP + i, b*L + t] = x[b, i, t - shift_k]   (0 where t < shift_k)
    # with shift_k = (K-1-k)*dilation, which reproduces causal left padding.
    for k in range(K):
        shift = (K - 1 - k) * dilation
        if ICP > IC:
            # Zero the IC -> ICP sublane-alignment rows (never written below).
            rhs_ref[pl.ds(k * ICP + IC, ICP - IC), :] = jnp.zeros(
                (ICP - IC, B * L), dtype=cdt)
        for b in range(B):
            hole = min(shift, L)
            if hole > 0:      # causal zero-pad columns of this (tap, batch)
                rhs_ref[pl.ds(k * ICP, IC), pl.ds(b * L, hole)] = jnp.zeros(
                    (IC, hole), dtype=cdt)
            valid = L - shift
            if valid > 0:     # shifted copy of this batch's (IC, L) slab
                rhs_ref[pl.ds(k * ICP, IC),
                        pl.ds(b * L + shift, valid)] = x_ref[0, b, :, :valid]

    # One MXU matmul per group for the whole batch; f32 accumulation.
    acc = jnp.dot(w_ref[0], rhs_ref[...],
                  preferred_element_type=jnp.float32)       # (OC, B*L)
    acc = acc + b_ref[0]                                     # (OC, 1) bcast
    o_ref[0] = acc.astype(o_ref.dtype)


def causal_conv1d(x, weight, bias, *, kernel_size, dilation,
                  compute_dtype=jnp.bfloat16):
    """x: (G, B, IC, L); weight: (G, OC, IC, K); bias: (G, OC, 1) -> (G, B, OC, L)."""
    G, B, IC, L = x.shape
    _, OC, _, K = weight.shape
    assert K == kernel_size
    ICP = -(-IC // 8) * 8          # per-tap IC rows padded to sublane multiple

    # im2col weight relayout: w2[g, o, k*ICP + i] = weight[g, o, i, k]
    wt = jnp.transpose(weight, (0, 1, 3, 2))                  # (G, OC, K, IC)
    wt = jnp.pad(wt, ((0, 0), (0, 0), (0, 0), (0, ICP - IC)))
    w2 = wt.reshape(G, OC, K * ICP).astype(compute_dtype)

    xc = x.astype(compute_dtype)
    bf = bias.astype(jnp.float32)

    kernel = functools.partial(
        _causal_conv1d_kernel, K=K, IC=IC, ICP=ICP, dilation=dilation)

    # VMEM budget: double-buffered I/O blocks + the im2col scratch.  Raises
    # the v5e default scoped limit (16 MiB); caps at v7x physical (64 MiB).
    itm = jnp.dtype(compute_dtype).itemsize
    blk_bytes = (B * IC * L + OC * K * ICP) * itm + OC * 4 \
        + OC * B * L * x.dtype.itemsize
    vmem_limit = int(min(max(4 * blk_bytes + K * ICP * B * L * itm
                             + (4 << 20), 32 << 20), 64 << 20))

    out2 = pl.pallas_call(
        kernel,
        out_shape=jax.ShapeDtypeStruct((G, OC, B * L), x.dtype),
        grid_spec=pltpu.PrefetchScalarGridSpec(
            num_scalar_prefetch=0,
            grid=(G,),
            in_specs=[
                pl.BlockSpec((1, B, IC, L), lambda g: (g, 0, 0, 0)),
                pl.BlockSpec((1, OC, K * ICP), lambda g: (g, 0, 0)),
                pl.BlockSpec((1, OC, 1), lambda g: (g, 0, 0)),
            ],
            out_specs=pl.BlockSpec((1, OC, B * L), lambda g: (g, 0, 0)),
            scratch_shapes=[pltpu.VMEM((K * ICP, B * L), compute_dtype)],
        ),
        compiler_params=pltpu.CompilerParams(
            dimension_semantics=("parallel",),
            vmem_limit_bytes=vmem_limit,
        ),
    )(xc, w2, bf)

    # Layout plumbing back to the module's (G, B, OC, L) output.
    return jnp.transpose(out2.reshape(G, OC, B, L), (0, 2, 1, 3))


def _reference(x, weight, bias, *, dilation):
    """Pure-JAX reference using lax.conv_general_dilated (per group)."""
    G, B, IC, L = x.shape
    _, OC, _, K = weight.shape
    pad = (K - 1) * dilation
    outs = []
    for g in range(G):
        y = lax.conv_general_dilated(
            x[g],                       # (B, IC, L)
            weight[g],                  # (OC, IC, K)
            window_strides=(1,),
            padding=[(pad, 0)],
            rhs_dilation=(dilation,),
            dimension_numbers=("NCH", "OIH", "NCH"),
        )
        outs.append(y + bias[g][None])  # bias[g]: (OC,1) -> bcast over (B,OC,L)
    return jnp.stack(outs, axis=0)      # (G, B, OC, L)


if __name__ == "__main__":
    # Module config (matches CausalConv1d(__init__) shapes)
    groups = 2
    batch = 2
    in_channels = 4
    out_channels = 4
    kernel_size = 3
    dilation = 2
    height = 16

    key = jax.random.PRNGKey(0)
    kx, kw, kb = jax.random.split(key, 3)

    # Input: (groups, batch, in_channels, height)
    x = jax.random.normal(kx, (groups, batch, in_channels, height), dtype=jnp.float32)

    # Conv1d(in_channels*groups, out_channels*groups, K, groups=groups) weights:
    # torch weight shape (groups*out_channels, in_channels, K) -> per-group view.
    fan_in = in_channels * kernel_size
    bound = 1.0 / (fan_in ** 0.5)
    weight = jax.random.uniform(
        kw, (groups, out_channels, in_channels, kernel_size),
        minval=-bound, maxval=bound, dtype=jnp.float32)
    bias = jax.random.uniform(
        kb, (groups, out_channels, 1), minval=-bound, maxval=bound,
        dtype=jnp.float32)

    # f32 compute path: exact check against the lax reference.
    out_f32 = causal_conv1d(x, weight, bias, kernel_size=kernel_size,
                            dilation=dilation, compute_dtype=jnp.float32)
    out_f32 = jax.block_until_ready(out_f32)
    assert out_f32.shape == (groups, batch, out_channels, height), out_f32.shape
    ref_f32 = _reference(x, weight, bias, dilation=dilation)
    assert jnp.allclose(out_f32, ref_f32, atol=1e-5, rtol=1e-5), "f32 mismatch"

    # bf16 compute path (default, bandwidth-optimized): compare against a
    # reference fed with identically bf16-rounded inputs (f32 accumulation).
    out_bf = causal_conv1d(x, weight, bias, kernel_size=kernel_size,
                           dilation=dilation, compute_dtype=jnp.bfloat16)
    out_bf = jax.block_until_ready(out_bf)
    assert out_bf.shape == (groups, batch, out_channels, height), out_bf.shape
    x_r = x.astype(jnp.bfloat16).astype(jnp.float32)
    w_r = weight.astype(jnp.bfloat16).astype(jnp.float32)
    ref_bf = _reference(x_r, w_r, bias, dilation=dilation)
    assert jnp.allclose(out_bf, ref_bf, atol=5e-4, rtol=5e-4), "bf16 mismatch"

    print("KERNEL_OK")
</pallas_src>

<mosaic_0001>
module attributes {stable_mosaic.version = 11 : i64} {
  func.func @_causal_conv1d_kernel(%arg0: i32, %arg1: memref<1x2x4x16xf32, #tpu.memory_space<vmem>>, %arg2: memref<1x4x24xf32, #tpu.memory_space<vmem>>, %arg3: memref<1x4x1xf32, #tpu.memory_space<vmem>>, %arg4: memref<1x4x32xf32, #tpu.memory_space<vmem>>, %arg5: memref<24x32xf32, #tpu.memory_space<vmem>>) attributes {dimension_semantics = [#tpu.dimension_semantics<parallel>], iteration_bounds = array<i64: 2>, scalar_prefetch = 0 : i64, scratch_operands = 1 : i64, tpu.core_type = #tpu.core_type<tc>, window_params = [{transform_indices = @transform_0, window_bounds = array<i64: 1, 2, 4, 16>}, {transform_indices = @transform_1, window_bounds = array<i64: 1, 4, 24>}, {transform_indices = @transform_2, window_bounds = array<i64: 1, 4, 1>}, {transform_indices = @transform_3, window_bounds = array<i64: 1, 4, 32>}]} {
    %cst = arith.constant 0.000000e+00 : f32
    %0 = vector.broadcast %cst : f32 to vector<4x32xf32>
    %c4 = arith.constant 4 : index
    %c0 = arith.constant 0 : index
    %1 = vector.load %arg5[%c4, %c0] : memref<24x32xf32, #tpu.memory_space<vmem>>, vector<4x32xf32>
    tpu.vector_store %arg5[%c4, %c0], %0 {strides = array<i32>} : memref<24x32xf32, #tpu.memory_space<vmem>>, vector<4x32xf32>,
    %cst_0 = arith.constant 0.000000e+00 : f32
    %2 = vector.broadcast %cst_0 : f32 to vector<4x4xf32>
    %c0_1 = arith.constant 0 : index
    %c0_2 = arith.constant 0 : index
    %3 = vector.load %arg5[%c0_1, %c0_2] : memref<24x32xf32, #tpu.memory_space<vmem>>, vector<4x4xf32>
    tpu.vector_store %arg5[%c0_1, %c0_2], %2 {strides = array<i32>} : memref<24x32xf32, #tpu.memory_space<vmem>>, vector<4x4xf32>,
    %c0_3 = arith.constant 0 : index
    %c0_4 = arith.constant 0 : index
    %c0_5 = arith.constant 0 : index
    %c0_6 = arith.constant 0 : index
    %4 = vector.load %arg1[%c0_3, %c0_4, %c0_5, %c0_6] : memref<1x2x4x16xf32, #tpu.memory_space<vmem>>, vector<1x1x4x12xf32>
    %5 = vector.shape_cast %4 : vector<1x1x4x12xf32> to vector<4x12xf32>
    %c0_7 = arith.constant 0 : index
    %c4_8 = arith.constant 4 : index
    %6 = vector.load %arg5[%c0_7, %c4_8] : memref<24x32xf32, #tpu.memory_space<vmem>>, vector<4x12xf32>
    tpu.vector_store %arg5[%c0_7, %c4_8], %5 {strides = array<i32>} : memref<24x32xf32, #tpu.memory_space<vmem>>, vector<4x12xf32>,
    %cst_9 = arith.constant 0.000000e+00 : f32
    %7 = vector.broadcast %cst_9 : f32 to vector<4x4xf32>
    %c0_10 = arith.constant 0 : index
    %c16 = arith.constant 16 : index
    %8 = vector.load %arg5[%c0_10, %c16] : memref<24x32xf32, #tpu.memory_space<vmem>>, vector<4x4xf32>
    tpu.vector_store %arg5[%c0_10, %c16], %7 {strides = array<i32>} : memref<24x32xf32, #tpu.memory_space<vmem>>, vector<4x4xf32>,
    %c0_11 = arith.constant 0 : index
    %c1 = arith.constant 1 : index
    %c0_12 = arith.constant 0 : index
    %c0_13 = arith.constant 0 : index
    %9 = vector.load %arg1[%c0_11, %c1, %c0_12, %c0_13] : memref<1x2x4x16xf32, #tpu.memory_space<vmem>>, vector<1x1x4x12xf32>
    %10 = vector.shape_cast %9 : vector<1x1x4x12xf32> to vector<4x12xf32>
    %c0_14 = arith.constant 0 : index
    %c20 = arith.constant 20 : index
    %11 = vector.load %arg5[%c0_14, %c20] : memref<24x32xf32, #tpu.memory_space<vmem>>, vector<4x12xf32>
    tpu.vector_store %arg5[%c0_14, %c20], %10 {strides = array<i32>} : memref<24x32xf32, #tpu.memory_space<vmem>>, vector<4x12xf32>,
    %cst_15 = arith.constant 0.000000e+00 : f32
    %12 = vector.broadcast %cst_15 : f32 to vector<4x32xf32>
    %c12 = arith.constant 12 : index
    %c0_16 = arith.constant 0 : index
    %13 = vector.load %arg5[%c12, %c0_16] : memref<24x32xf32, #tpu.memory_space<vmem>>, vector<4x32xf32>
    tpu.vector_store %arg5[%c12, %c0_16], %12 {strides = array<i32>} : memref<24x32xf32, #tpu.memory_space<vmem>>, vector<4x32xf32>,
    %cst_17 = arith.constant 0.000000e+00 : f32
    %14 = vector.broadcast %cst_17 : f32 to vector<4x2xf32>
    %c8 = arith.constant 8 : index
    %c0_18 = arith.constant 0 : index
    %15 = vector.load %arg5[%c8, %c0_18] : memref<24x32xf32, #tpu.memory_space<vmem>>, vector<4x2xf32>
    tpu.vector_store %arg5[%c8, %c0_18], %14 {strides = array<i32>} : memref<24x32xf32, #tpu.memory_space<vmem>>, vector<4x2xf32>,
    %c0_19 = arith.constant 0 : index
    %c0_20 = arith.constant 0 : index
    %c0_21 = arith.constant 0 : index
    %c0_22 = arith.constant 0 : index
    %16 = vector.load %arg1[%c0_19, %c0_20, %c0_21, %c0_22] : memref<1x2x4x16xf32, #tpu.memory_space<vmem>>, vector<1x1x4x14xf32>
    %17 = vector.shape_cast %16 : vector<1x1x4x14xf32> to vector<4x14xf32>
    %c8_23 = arith.constant 8 : index
    %c2 = arith.constant 2 : index
    %18 = vector.load %arg5[%c8_23, %c2] : memref<24x32xf32, #tpu.memory_space<vmem>>, vector<4x14xf32>
    tpu.vector_store %arg5[%c8_23, %c2], %17 {strides = array<i32>} : memref<24x32xf32, #tpu.memory_space<vmem>>, vector<4x14xf32>,
    %cst_24 = arith.constant 0.000000e+00 : f32
    %19 = vector.broadcast %cst_24 : f32 to vector<4x2xf32>
    %c8_25 = arith.constant 8 : index
    %c16_26 = arith.constant 16 : index
    %20 = vector.load %arg5[%c8_25, %c16_26] : memref<24x32xf32, #tpu.memory_space<vmem>>, vector<4x2xf32>
    tpu.vector_store %arg5[%c8_25, %c16_26], %19 {strides = array<i32>} : memref<24x32xf32, #tpu.memory_space<vmem>>, vector<4x2xf32>,
    %c0_27 = arith.constant 0 : index
    %c1_28 = arith.constant 1 : index
    %c0_29 = arith.constant 0 : index
    %c0_30 = arith.constant 0 : index
    %21 = vector.load %arg1[%c0_27, %c1_28, %c0_29, %c0_30] : memref<1x2x4x16xf32, #tpu.memory_space<vmem>>, vector<1x1x4x14xf32>
    %22 = vector.shape_cast %21 : vector<1x1x4x14xf32> to vector<4x14xf32>
    %c8_31 = arith.constant 8 : index
    %c18 = arith.constant 18 : index
    %23 = vector.load %arg5[%c8_31, %c18] : memref<24x32xf32, #tpu.memory_space<vmem>>, vector<4x14xf32>
    tpu.vector_store %arg5[%c8_31, %c18], %22 {strides = array<i32>} : memref<24x32xf32, #tpu.memory_space<vmem>>, vector<4x14xf32>,
    %cst_32 = arith.constant 0.000000e+00 : f32
    %24 = vector.broadcast %cst_32 : f32 to vector<4x32xf32>
    %c20_33 = arith.constant 20 : index
    %c0_34 = arith.constant 0 : index
    %25 = vector.load %arg5[%c20_33, %c0_34] : memref<24x32xf32, #tpu.memory_space<vmem>>, vector<4x32xf32>
    tpu.vector_store %arg5[%c20_33, %c0_34], %24 {strides = array<i32>} : memref<24x32xf32, #tpu.memory_space<vmem>>, vector<4x32xf32>,
    %c0_35 = arith.constant 0 : index
    %c0_36 = arith.constant 0 : index
    %c0_37 = arith.constant 0 : index
    %c0_38 = arith.constant 0 : index
    %26 = vector.load %arg1[%c0_35, %c0_36, %c0_37, %c0_38] : memref<1x2x4x16xf32, #tpu.memory_space<vmem>>, vector<1x1x4x16xf32>
    %27 = vector.shape_cast %26 : vector<1x1x4x16xf32> to vector<4x16xf32>
    %c16_39 = arith.constant 16 : index
    %c0_40 = arith.constant 0 : index
    %28 = vector.load %arg5[%c16_39, %c0_40] : memref<24x32xf32, #tpu.memory_space<vmem>>, vector<4x16xf32>
    tpu.vector_store %arg5[%c16_39, %c0_40], %27 {strides = array<i32>} : memref<24x32xf32, #tpu.memory_space<vmem>>, vector<4x16xf32>,
    %c0_41 = arith.constant 0 : index
    %c1_42 = arith.constant 1 : index
    %c0_43 = arith.constant 0 : index
    %c0_44 = arith.constant 0 : index
    %29 = vector.load %arg1[%c0_41, %c1_42, %c0_43, %c0_44] : memref<1x2x4x16xf32, #tpu.memory_space<vmem>>, vector<1x1x4x16xf32>
    %30 = vector.shape_cast %29 : vector<1x1x4x16xf32> to vector<4x16xf32>
    %c16_45 = arith.constant 16 : index
    %c16_46 = arith.constant 16 : index
    %31 = vector.load %arg5[%c16_45, %c16_46] : memref<24x32xf32, #tpu.memory_space<vmem>>, vector<4x16xf32>
    tpu.vector_store %arg5[%c16_45, %c16_46], %30 {strides = array<i32>} : memref<24x32xf32, #tpu.memory_space<vmem>>, vector<4x16xf32>,
    %c0_47 = arith.constant 0 : index
    %c0_48 = arith.constant 0 : index
    %c0_49 = arith.constant 0 : index
    %32 = vector.load %arg2[%c0_47, %c0_48, %c0_49] : memref<1x4x24xf32, #tpu.memory_space<vmem>>, vector<1x4x24xf32>
    %33 = vector.shape_cast %32 : vector<1x4x24xf32> to vector<4x24xf32>
    %c0_50 = arith.constant 0 : index
    %c0_51 = arith.constant 0 : index
    %34 = vector.load %arg5[%c0_50, %c0_51] : memref<24x32xf32, #tpu.memory_space<vmem>>, vector<24x32xf32>
    %cst_52 = arith.constant dense<0.000000e+00> : vector<4x32xf32>
    %35 = tpu.matmul %33, %34, %cst_52 {dimension_numbers = #tpu.dot_dimension_numbers<[1], [0], [0], [1], [0, 0, 1, 1], [], []>} : vector<4x24xf32>, vector<24x32xf32>, vector<4x32xf32> -> vector<4x32xf32>
    %c0_53 = arith.constant 0 : index
    %c0_54 = arith.constant 0 : index
    %c0_55 = arith.constant 0 : index
    %36 = vector.load %arg3[%c0_53, %c0_54, %c0_55] : memref<1x4x1xf32, #tpu.memory_space<vmem>>, vector<1x4x1xf32>
    %37 = vector.shape_cast %36 : vector<1x4x1xf32> to vector<4x1xf32>
    %38 = vector.broadcast %37 : vector<4x1xf32> to vector<4x32xf32>
    %39 = arith.addf %35, %38 : vector<4x32xf32>
    %c0_56 = arith.constant 0 : index
    %c0_57 = arith.constant 0 : index
    %c0_58 = arith.constant 0 : index
    %40 = vector.load %arg4[%c0_56, %c0_57, %c0_58] : memref<1x4x32xf32, #tpu.memory_space<vmem>>, vector<1x4x32xf32>
    %41 = vector.shape_cast %40 : vector<1x4x32xf32> to vector<4x32xf32>
    %42 = vector.shape_cast %39 : vector<4x32xf32> to vector<1x4x32xf32>
    tpu.vector_store %arg4[%c0_56, %c0_57, %c0_58], %42 {strides = array<i32>} : memref<1x4x32xf32, #tpu.memory_space<vmem>>, vector<1x4x32xf32>,
    return
  }
  func.func @transform_0(%arg0: i32) -> (i32, i32, i32, i32) {
    %c0_i32 = arith.constant 0 : i32
    %c0_i32_0 = arith.constant 0 : i32
    %c0_i32_1 = arith.constant 0 : i32
    %c0_i32_2 = arith.constant 0 : i32
    return %arg0, %c0_i32, %c0_i32_0, %c0_i32_1 : i32, i32, i32, i32
  }
  func.func @transform_1(%arg0: i32) -> (i32, i32, i32) {
    %c0_i32 = arith.constant 0 : i32
    %c0_i32_0 = arith.constant 0 : i32
    %c0_i32_1 = arith.constant 0 : i32
    return %arg0, %c0_i32, %c0_i32_0 : i32, i32, i32
  }
  func.func @transform_2(%arg0: i32) -> (i32, i32, i32) {
    %c0_i32 = arith.constant 0 : i32
    %c0_i32_0 = arith.constant 0 : i32
    %c0_i32_1 = arith.constant 0 : i32
    return %arg0, %c0_i32, %c0_i32_0 : i32, i32, i32
  }
  func.func @transform_3(%arg0: i32) -> (i32, i32, i32) {
    %c0_i32 = arith.constant 0 : i32
    %c0_i32_0 = arith.constant 0 : i32
    %c0_i32_1 = arith.constant 0 : i32
    return %arg0, %c0_i32, %c0_i32_0 : i32, i32, i32
  }
}

</mosaic_0001>

<llo_original>
// kernel: tpu_custom_call.1
$region0: #{tpu_custom_call.1}
  #allocation0 [shape = 'u32[]', space=smem, size = 0x4, offset = 0x4, fixed_abs, tag = 'smem constant byte address 0x4 - core index']
  #allocation1 [shape = 'u32[144,128]{1,0:T(1,128)}', space=vmem, size = 0x12000, scoped, tag = 'internal scratch']
  #allocation2 [shape = 'f32[24,32]{1,0:T(8,128)}', space=vmem, size = 0x3000, scoped, tag = 'scratch operand']
  %s0 = inlined_call_operand.hbm [shape: f32[2,2,4,16], index: 0, kind: input, shape index: {}]
  %s1 = inlined_call_operand.vmem [shape: f32[2,4,24], index: 1, kind: input, shape index: {}]
  %s2 = inlined_call_operand.vmem [shape: f32[2,4,1], index: 2, kind: input, shape index: {}]
  %s3 = inlined_call_operand.hbm [shape: f32[2,4,32], index: 3, kind: output, shape index: {}]
  %s4 = sld [smem:[#allocation0]]
  $region49: #{tpu_custom_call.1} parent=0
    _
  %s6 = ssub.s32 1, %s4
  %s7 = scalar_select 0, %s6, %s4
  $region1: #{tpu_custom_call.1} parent=0
    #allocation3 [shape = 'u8[8192]{0}', space=vmem, size = 0x2000, scoped, tag = 'input window, operand 0']
    #allocation4 [shape = 's32[2]{0}', space=sflag, size = 0x8, scoped, tag = 'scoped memory for tpu_custom_call.1']
    #allocation5 [shape = 's32[2]{0}', space=sflag, size = 0x8, scoped, tag = 'scoped memory for tpu_custom_call.1']
    #allocation6 [shape = 'u8[4096]{0}', space=vmem, size = 0x1000, scoped, tag = 'output window, operand 0']
    %8 = vsyncpa [#allocation4], 0
    %s9 = scalar_lea.sflag [#allocation4], 1
    %10 = vsyncpa %s9, 0
    %11 = vsyncpa [#allocation5], 0
    %s12 = scalar_lea.sflag [#allocation5], 1
    %13 = vsyncpa %s12, 0
    loop: start=0, step=1, limit=4
    $region2: #{tpu_custom_call.1} parent=1 // loop_pre_header
      _
    $region3: #{tpu_custom_call.1} parent=1 // loop_header
      %s15 = sphi 0, %s19
      %p16 = scmp.ge.s32.totalorder %s15, 4
      %s25 = sphi 0, %s27
      %s28 = sphi 0, %s25
      %s29 = sphi 0, %s28
      %s45 = sphi 0, %s29
      %s51 = sphi 0, %s53
      %s54 = sphi 0, %s51
      %s55 = sphi 0, %s54
      %s71 = sphi 0, %s55
      %s77 = sphi 0, %s79
      %s80 = sphi 0, %s77
      %s81 = sphi 0, %s80
      %s97 = sphi 0, %s81
      %s103 = sphi 0, %s105
      %s106 = sphi 0, %s103
      %s107 = sphi 0, %s106
      %s123 = sphi 0, %s107
    $region4: #{tpu_custom_call.1} parent=1 // loop_header_branch
      %18 = sbr.rel (%p16) target = $region8
    $region5: #{tpu_custom_call.1} parent=1 // loop_body
      %s20 = ssub.s32 %s15, 1
      %s21 = ssub.s32 %s15, 2
      %s22 = sadd.s32 %s15, 1
      %s23 = ssub.s32 %s15, %s22
      %p24 = scmp.eq.s32.totalorder %s23, 0
      %s26 = sadd.s32 %s25, 1
      %s27 = scalar_select %p24, %s25, %s26
      %p30 = pneg %p24
      %p31 = scmp.eq.s32.totalorder %s15, 1
      %p32 = por %p30, %p31
      %p33 = scmp.ne.s32.totalorder %s25, %s28
      %p34 = scmp.eq.s32.totalorder %s15, 0
      %p35 = por %p33, %p34
      %p36 = scmp.ne.s32.totalorder %s25, %s28
      %p37 = scmp.eq.s32.totalorder %s20, 1
      %p38 = por %p36, %p37
      %p39 = scmp.ne.s32.totalorder %s28, %s29
      %p40 = scmp.eq.s32.totalorder %s20, 0
      %p41 = por %p39, %p40
      %p42 = scmp.ne.s32.totalorder %s28, %s29
      %p43 = scmp.eq.s32.totalorder %s21, 1
      %p44 = por %p42, %p43
      %p46 = scmp.ne.s32.totalorder %s29, %s45
      %p47 = scmp.eq.s32.totalorder %s21, 0
      %p48 = por %p46, %p47
      %s49 = ssub.s32 %s15, %s22
      %p50 = scmp.eq.s32.totalorder %s49, 0
      %s52 = sadd.s32 %s51, 1
      %s53 = scalar_select %p50, %s51, %s52
      %p56 = pneg %p50
      %p57 = scmp.eq.s32.totalorder %s15, 1
      %p58 = por %p56, %p57
      %p59 = scmp.ne.s32.totalorder %s51, %s54
      %p60 = scmp.eq.s32.totalorder %s15, 0
      %p61 = por %p59, %p60
      %p62 = scmp.ne.s32.totalorder %s51, %s54
      %p63 = scmp.eq.s32.totalorder %s20, 1
      %p64 = por %p62, %p63
      %p65 = scmp.ne.s32.totalorder %s54, %s55
      %p66 = scmp.eq.s32.totalorder %s20, 0
      %p67 = por %p65, %p66
      %p68 = scmp.ne.s32.totalorder %s54, %s55
      %p69 = scmp.eq.s32.totalorder %s21, 1
      %p70 = por %p68, %p69
      %p72 = scmp.ne.s32.totalorder %s55, %s71
      %p73 = scmp.eq.s32.totalorder %s21, 0
      %p74 = por %p72, %p73
      %s75 = ssub.s32 %s15, %s22
      %p76 = scmp.eq.s32.totalorder %s75, 0
      %s78 = sadd.s32 %s77, 1
      %s79 = scalar_select %p76, %s77, %s78
      %p82 = pneg %p76
      %p83 = scmp.eq.s32.totalorder %s15, 1
      %p84 = por %p82, %p83
      %p85 = scmp.ne.s32.totalorder %s77, %s80
      %p86 = scmp.eq.s32.totalorder %s15, 0
      %p87 = por %p85, %p86
      %p88 = scmp.ne.s32.totalorder %s77, %s80
      %p89 = scmp.eq.s32.totalorder %s20, 1
      %p90 = por %p88, %p89
      %p91 = scmp.ne.s32.totalorder %s80, %s81
      %p92 = scmp.eq.s32.totalorder %s20, 0
      %p93 = por %p91, %p92
      %p94 = scmp.ne.s32.totalorder %s80, %s81
      %p95 = scmp.eq.s32.totalorder %s21, 1
      %p96 = por %p94, %p95
      %p98 = scmp.ne.s32.totalorder %s81, %s97
      %p99 = scmp.eq.s32.totalorder %s21, 0
      %p100 = por %p98, %p99
      %s101 = ssub.s32 %s15, %s22
      %p102 = scmp.eq.s32.totalorder %s101, 0
      %s104 = sadd.s32 %s103, 1
      %s105 = scalar_select %p102, %s103, %s104
      %p108 = pneg %p102
      %p109 = scmp.eq.s32.totalorder %s15, 1
      %p110 = por %p108, %p109
      %p111 = scmp.ne.s32.totalorder %s103, %s106
      %p112 = scmp.eq.s32.totalorder %s15, 0
      %p113 = por %p111, %p112
      %p114 = scmp.ne.s32.totalorder %s103, %s106
      %p115 = scmp.eq.s32.totalorder %s20, 1
      %p116 = por %p114, %p115
      %p117 = scmp.ne.s32.totalorder %s106, %s107
      %p118 = scmp.eq.s32.totalorder %s20, 0
      %p119 = por %p117, %p118
      %p120 = scmp.ne.s32.totalorder %s106, %s107
      %p121 = scmp.eq.s32.totalorder %s21, 1
      %p122 = por %p120, %p121
      %p124 = scmp.ne.s32.totalorder %s107, %s123
      %p125 = scmp.eq.s32.totalorder %s21, 0
      %p126 = por %p124, %p125
      %p127 = scmp.le.s32.totalorder 1, %s15
      %p128 = scmp.lt.s32.totalorder %s15, 3
      %p129 = pnand %p127, %p128
      %p130 = pneg %p129
      // Predicated region
      $region9: #{tpu_custom_call.1} parent=5 // pred_check
        _
      $region10: #{tpu_custom_call.1} parent=5 // pred_check_branch
        %132 = sbr.rel (%p129) target = $region12
      $region11: #{tpu_custom_call.1} parent=5 // pred_region
        %s133 = ssub.s32 %s15, 1
      $region12: #{tpu_custom_call.1} parent=5 // pred_fallthru
        _
      %p134 = scmp.lt.s32.totalorder %s15, 2
      // Predicated region
      $region13: #{tpu_custom_call.1} parent=5 // pred_check
        %p135 = pneg %p134
      $region14: #{tpu_custom_call.1} parent=5 // pred_check_branch
        %137 = sbr.rel (%p135) target = $region16
      $region15: #{tpu_custom_call.1} parent=5 // pred_region
        // Predicated region
        $region17: #{tpu_custom_call.1} parent=15 // pred_check
          %p138 = pneg %p35
        $region18: #{tpu_custom_call.1} parent=15 // pred_check_branch
          %140 = sbr.rel (%p138) target = $region20
        $region19: #{tpu_custom_call.1} parent=15 // pred_region
          %s141 = sand.u32 %s25, 1
          %s142 = scalar_lea.sflag [#allocation4], %s141
          %s143 = sand.u32 %s25, 1
          %s144 = smul.addr %s143, 8
          %s145 = scalar_lea.vmem [#allocation3], %s144
          %s147 = ssub.s32 128, 128
          %148 = vsyncadd %s142, %s147
          %s149 = smul.addr %s15, 2
          %s150 = smul.addr %s149, 64
          %s151 = scalar_lea.hbm %s0, %s150
          %s152 = sshll.u32 %s145, 4
          %s153 = int_to_ptr.vmem [resolvable:$true] %s152
          %158 = dma.hbm_to_vmem [thread:$0]  %s151, 128, %s153, %s142, 64, 64, 4
        $region20: #{tpu_custom_call.1} parent=15 // pred_fallthru
          _
        // Predicated region
        $region21: #{tpu_custom_call.1} parent=15 // pred_check
          %p159 = pneg %p61
        $region22: #{tpu_custom_call.1} parent=15 // pred_check_branch
          %161 = sbr.rel (%p159) target = $region24
        $region23: #{tpu_custom_call.1} parent=15 // pred_region
          %p162 = scmp.lt.s32.totalorder %s15, 1
          %s163 = scalar_select %p162, %s15, 1
          %s164 = smul.addr %s163, 4
          %s165 = scalar_lea.vmem %s1, %s164
        $region24: #{tpu_custom_call.1} parent=15 // pred_fallthru
          _
        // Predicated region
        $region25: #{tpu_custom_call.1} parent=15 // pred_check
          %p166 = pneg %p87
        $region26: #{tpu_custom_call.1} parent=15 // pred_check_branch
          %168 = sbr.rel (%p166) target = $region28
        $region27: #{tpu_custom_call.1} parent=15 // pred_region
          %p169 = scmp.lt.s32.totalorder %s15, 1
          %s170 = scalar_select %p169, %s15, 1
          %s171 = smul.addr %s170, 4
          %s172 = scalar_lea.vmem %s2, %s171
        $region28: #{tpu_custom_call.1} parent=15 // pred_fallthru
          _
      $region16: #{tpu_custom_call.1} parent=5 // pred_fallthru
        _
      %p173 = scmp.le.s32.totalorder 1, %s15
      %p174 = scmp.lt.s32.totalorder %s15, 3
      %p175 = pnand %p173, %p174
      %p176 = pneg %p175
      // Predicated region
      $region29: #{tpu_custom_call.1} parent=5 // pred_check
        _
      $region30: #{tpu_custom_call.1} parent=5 // pred_check_branch
        %178 = sbr.rel (%p175) target = $region32
      $region31: #{tpu_custom_call.1} parent=5 // pred_region
        %s179 = ssub.s32 %s15, 1
        %s180 = sand.u32 %s28, 1
        %s181 = scalar_lea.sflag [#allocation4], %s180
        %s182 = sand.u32 %s28, 1
        %s183 = smul.addr %s182, 8
        %s184 = scalar_lea.vmem [#allocation3], %s183
        // Predicated region
        $region33: #{tpu_custom_call.1} parent=31 // pred_check
          %p185 = pneg %p41
        $region34: #{tpu_custom_call.1} parent=31 // pred_check_branch
          %187 = sbr.rel (%p185) target = $region36
        $region35: #{tpu_custom_call.1} parent=31 // pred_region
          %188 = dma.done %s181, 128
        $region36: #{tpu_custom_call.1} parent=31 // pred_fallthru
          _
        %s189 = sand.u32 %s28, 1
        %s190 = scalar_lea.sflag [#allocation4], %s189
        %s191 = sand.u32 %s28, 1
        %s192 = smul.addr %s191, 8
        %s193 = scalar_lea.vmem [#allocation3], %s192
        %p194 = pneg %p41
        %p195 = pneg %p38
        %p196 = scmp.lt.s32.totalorder %s20, 1
        %s197 = scalar_select %p196, %s20, 1
        %s198 = smul.addr %s197, 4
        %s199 = scalar_lea.vmem %s1, %s198
        %p200 = pneg %p67
        %p201 = pneg %p64
        %p202 = scmp.lt.s32.totalorder %s20, 1
        %s203 = scalar_select %p202, %s20, 1
        %s204 = smul.addr %s203, 4
        %s205 = scalar_lea.vmem %s2, %s204
        %p206 = pneg %p93
        %p207 = pneg %p90
        %p208 = pneg %p119
        %p209 = pneg %p116
        %s210 = sand.u32 %s106, 1
        %s211 = scalar_lea.sflag [#allocation5], %s210
        %s212 = sand.u32 %s106, 1
        %s213 = smul.addr %s212, 4
        %s214 = scalar_lea.vmem [#allocation6], %s213
        %p215 = scmp.lt.s32.totalorder %s20, 1
        %s216 = scalar_select %p215, %s20, 1
        %s217 = smul.addr %s216, 4
        %s218 = scalar_lea.vmem %s1, %s217
        %p219 = scmp.lt.s32.totalorder %s20, 1
        %s220 = scalar_select %p219, %s20, 1
        %s221 = smul.addr %s220, 4
        %s222 = scalar_lea.vmem %s2, %s221
        %vm223 = vcmask 257024
        %224 = vst.msk [vmem:[#allocation2 + $0x4] sm:$0xf] %vm223, 0.0
        %vm225 = vcmask 27648
        %226 = vst.msk [vmem:[#allocation2] sm:$0xf] %vm225, 0.0
        %v227 = vld [vmem:[%s184] sm:$0xf]
        %229 = vrot.lane.b32.xlu0 %v227, 4
        %v230 = vpop.permute.xlu0 %229
        %vm232 = vcmask 125984
        %233 = vst.msk [vmem:[#allocation2] sm:$0xf] %vm232, %v230
        %vm234 = vcmask 158848
        %235 = vst.msk [vmem:[#allocation2] sm:$0xf] %vm234, 0.0
        %s236 = scalar_lea.vmem %s184, 4 [#allocation3]
        %v237 = vld [vmem:[%s236] sm:$0xf]
        %239 = vrot.lane.b32.xlu0 %v237, 20
        %v240 = vpop.permute.xlu0 %239
        %vm242 = vcmask 257184
        %243 = vst.msk [vmem:[#allocation2] sm:$0xf] %vm242, %v240
        %244 = vst.msk [vmem:[#allocation2 + $0xc] sm:$0xf] %vm223, 0.0
        %vm245 = vcmask 11264
        %246 = vst.msk [vmem:[#allocation2 + $0x8] sm:$0xf] %vm245, 0.0
        %v247 = vld [vmem:[%s184] sm:$0xf]
        %249 = vrot.lane.b32.xlu0 %v247, 2
        %v250 = vpop.permute.xlu0 %249
        %vm252 = vcmask 125968
        %253 = vst.msk [vmem:[#allocation2 + $0x8] sm:$0xf] %vm252, %v250
        %vm254 = vcmask 142464
        %255 = vst.msk [vmem:[#allocation2 + $0x8] sm:$0xf] %vm254, 0.0
        %v256 = vld [vmem:[%s236] sm:$0xf]
        %258 = vrot.lane.b32.xlu0 %v256, 18
        %v259 = vpop.permute.xlu0 %258
        %vm261 = vcmask 257168
        %262 = vst.msk [vmem:[#allocation2 + $0x8] sm:$0xf] %vm261, %v259
        %263 = vst.msk [vmem:[#allocation2 + $0x14] sm:$0xf] %vm223, 0.0
        %v264 = vld [vmem:[%s184] sm:$0xf]
        %vm265 = vcmask 125952
        %266 = vst.msk [vmem:[#allocation2 + $0x10] sm:$0xf] %vm265, %v264
        %v267 = vld [vmem:[%s236] sm:$0xf]
        %269 = vrot.lane.b32.xlu0 %v267, 16
        %v270 = vpop.permute.xlu0 %269
        %vm272 = vcmask 257152
        %273 = vst.msk [vmem:[#allocation2 + $0x10] sm:$0xf] %vm272, %v270
        %v274 = vld [vmem:[%s218] sm:$0xf]
        %v275 = vld [vmem:[#allocation2] sm:$0xff]
        %v276 = vld [vmem:[#allocation2 + $0x8] sm:$0xff]
        %v277 = vld [vmem:[#allocation2 + $0x10] sm:$0xff]
        %v278 = vld [vmem:[%s222] sm:$0xf]
        %280 = vset.pattern.permute.xlu0 0
        %281 = vperm.xlu0 %280, %v278
        %v282 = vpop.permute.xlu0 %281
        %vm284 = vcmask 195584
        %v286 = vsel %vm284, %v274, 0
        %288 = vmatprep.subr.mxu0 0.0
        %289 = vmatpush1.msra.mxu0 %v275
        %290 = vmatprep.subr.mxu0 0.0
        %291 = vmatpush1.msra.mxu0 %v276
        %292 = vmatprep.subr.mxu0 0.0
        %293 = vmatpush1.msra.mxu0 %v277
        %294 = vmatprep.subr.mxu0 0.0
        %295 = vmatpush1.msra.mxu0 0.0
        %296 = vmatprep.subr.mxu0 0.0
        %297 = vmatpush1.msra.mxu0 0.0
        %298 = vmatprep.subr.mxu0 0.0
        %299 = vmatpush1.msra.mxu0 0.0
        %300 = vmatprep.subr.mxu0 0.0
        %301 = vmatpush1.msra.mxu0 0.0
        %302 = vmatprep.subr.mxu0 0.0
        %303 = vmatpush1.msra.mxu0 0.0
        %304 = vmatprep.subr.mxu0 0.0
        %305 = vmatpush1.msra.mxu0 0.0
        %306 = vmatprep.subr.mxu0 0.0
        %307 = vmatpush1.msra.mxu0 0.0
        %308 = vmatprep.subr.mxu0 0.0
        %309 = vmatpush1.msra.mxu0 0.0
        %310 = vmatprep.subr.mxu0 0.0
        %311 = vmatpush1.msra.mxu0 0.0
        %312 = vmatprep.subr.mxu0 0.0
        %313 = vmatpush1.msra.mxu0 0.0
        %314 = vmatprep.subr.mxu0 0.0
        %315 = vmatpush1.msra.mxu0 0.0
        %316 = vmatprep.subr.mxu0 0.0
        %317 = vmatpush1.msra.mxu0 0.0
        %318 = vmatprep.subr.mxu0 0.0
        %319 = vmatpush1.msra.mxu0 0.0
        %320 = vmatprep.subr.mxu0 0.0
        %321 = vmatpush1.msra.mxu0 0.0
        %322 = vmatprep.subr.mxu0 0.0
        %323 = vmatpush1.msra.mxu0 0.0
        %324 = vmatprep.subr.mxu0 0.0
        %325 = vmatpush1.msra.mxu0 0.0
        %326 = vmatprep.subr.mxu0 0.0
        %327 = vmatpush1.msra.mxu0 0.0
        %328 = vmatprep.subr.mxu0 0.0
        %329 = vmatpush1.msra.mxu0 0.0
        %330 = vmatprep.subr.mxu0 0.0
        %331 = vmatpush1.msra.mxu0 0.0
        %332 = vmatprep.subr.mxu0 0.0
        %333 = vmatpush1.msra.mxu0 0.0
        %334 = vmatprep.subr.mxu0 0.0
        %335 = vmatpush1.msra.mxu0 0.0
        %336 = vmatprep.subr.mxu0 0.0
        %337 = vmatpush1.msra.mxu0 0.0
        %338 = vmatprep.subr.mxu0 0.0
        %339 = vmatpush1.msra.mxu0 0.0
        %340 = vmatprep.subr.mxu0 0.0
        %341 = vmatpush1.msra.mxu0 0.0
        %342 = vmatprep.subr.mxu0 0.0
        %343 = vmatpush1.msra.mxu0 0.0
        %344 = vmatprep.subr.mxu0 0.0
        %345 = vmatpush1.msra.mxu0 0.0
        %346 = vmatprep.subr.mxu0 0.0
        %347 = vmatpush1.msra.mxu0 0.0
        %348 = vmatprep.subr.mxu0 0.0
        %349 = vmatpush1.msra.mxu0 0.0
        %350 = vmatprep.subr.mxu0 0.0
        %351 = vmatpush1.msra.mxu0 0.0
        %352 = vmatprep.mubr.f32.mxu0 0.0
        %353 = vmatmul.mubr.f32.gmra.mrb[0].mxu0 %v286
        %v354 = vpop.f32.mrb[0].mxu0
        %v355 = vadd.f32 %v282, %v354
        %v356 = vpop.f32.mrb[0].mxu0
        %357 = vdwg.mxu0
        %358 = vst.msk [vmem:[%s214] sm:$0xf] %vm223, %v355
        %s359 = sand.u32 %s106, 1
        %s360 = scalar_lea.sflag [#allocation5], %s359
        %s361 = sand.u32 %s106, 1
        %s362 = smul.addr %s361, 4
        %s363 = scalar_lea.vmem [#allocation6], %s362
        // Predicated region
        $region37: #{tpu_custom_call.1} parent=31 // pred_check
          %p364 = pneg %p116
        $region38: #{tpu_custom_call.1} parent=31 // pred_check_branch
          %366 = sbr.rel (%p364) target = $region40
        $region39: #{tpu_custom_call.1} parent=31 // pred_region
          %s368 = ssub.s32 64, 64
          %369 = vsyncadd %s360, %s368
          %s370 = smul.addr %s20, 64
          %s371 = scalar_lea.hbm %s3, %s370
          %s373 = sshll.u32 %s363, 4
          %s374 = int_to_ptr.vmem [resolvable:$true] %s373
          %376 = dma.vmem_to_hbm [thread:$0]  %s374, 64, %s371, %s360
        $region40: #{tpu_custom_call.1} parent=31 // pred_fallthru
          _
      $region32: #{tpu_custom_call.1} parent=5 // pred_fallthru
        _
      %p377 = scmp.le.s32.totalorder 2, %s15
      // Predicated region
      $region41: #{tpu_custom_call.1} parent=5 // pred_check
        %p378 = pneg %p377
      $region42: #{tpu_custom_call.1} parent=5 // pred_check_branch
        %380 = sbr.rel (%p378) target = $region44
      $region43: #{tpu_custom_call.1} parent=5 // pred_region
        %s381 = ssub.s32 %s15, 2
        // Predicated region
        $region45: #{tpu_custom_call.1} parent=43 // pred_check
          %p382 = pneg %p122
        $region46: #{tpu_custom_call.1} parent=43 // pred_check_branch
          %384 = sbr.rel (%p382) target = $region48
        $region47: #{tpu_custom_call.1} parent=43 // pred_region
          %s385 = sand.u32 %s107, 1
          %s386 = scalar_lea.sflag [#allocation5], %s385
          %s387 = sand.u32 %s107, 1
          %s388 = smul.addr %s387, 4
          %s389 = scalar_lea.vmem [#allocation6], %s388
          %390 = dma.done %s386, 64
        $region48: #{tpu_custom_call.1} parent=43 // pred_fallthru
          _
      $region44: #{tpu_custom_call.1} parent=5 // pred_fallthru
        _
    $region6: #{tpu_custom_call.1} parent=1 // loop_footer
      %s19 = sadd.s32 1, %s15
    $region7: #{tpu_custom_call.1} parent=1 // loop_footer_branch
      %14 = sbr.rel target = $region3
    $region8: #{tpu_custom_call.1} parent=1 // loop_exit
      _
    %391 = vsyncpa [#allocation4], 1
    %s392 = scalar_lea.sflag [#allocation4], 1
    %393 = vsyncpa %s392, 1
    %394 = vsyncpa [#allocation5], 1
    %s395 = scalar_lea.sflag [#allocation5], 1
    %396 = vsyncpa %s395, 1

</llo_original>
